<compile_context>
chip_gen: v7x
topology: tpu7x:2x2x1
jax: 0.10.0
libtpu: 0.0.40
codegen_flags: <defaults>
</compile_context>

<pallas_src>
import jax
import jax.numpy as jnp
from jax.experimental import pallas as pl
from jax.experimental.pallas import tpu as pltpu

EPS = 1e-5
VMEM_LIMIT = 32 * 1024 * 1024  # conservative: fits v5e/v6e/v7x scoped VMEM


def conv_stats_kernel(w_ref, p_ref, sum_ref, ssq_ref):
    """Pass 1: conv matmul for one M-tile + per-channel sum / sum-of-squares."""
    acc = jnp.dot(w_ref[...], p_ref[...], preferred_element_type=jnp.float32)

    @pl.when(pl.program_id(0) == 0)
    def _():
        sum_ref[...] = jnp.zeros_like(sum_ref)
        ssq_ref[...] = jnp.zeros_like(ssq_ref)

    sum_ref[...] += jnp.sum(acc, axis=1, keepdims=True)
    ssq_ref[...] += jnp.sum(acc * acc, axis=1, keepdims=True)


def conv_bn_pool_kernel(w_ref, p_ref, scale_ref, shift_ref, out_ref):
    """Pass 2: conv matmul + folded BN affine + 2x2 max-pool + ReLU6 (lane-dense)."""
    acc = jnp.dot(w_ref[...], p_ref[...], preferred_element_type=jnp.float32)
    y = acc * scale_ref[...] + shift_ref[...]              # (Cout, TM) * (Cout, 1)
    tp = out_ref.shape[1]                                  # output pixels in this tile
    pooled = jnp.maximum(
        jnp.maximum(y[:, 0:tp], y[:, tp:2 * tp]),
        jnp.maximum(y[:, 2 * tp:3 * tp], y[:, 3 * tp:4 * tp]),
    )
    out_ref[...] = jnp.clip(pooled, 0.0, 6.0)


def _choose_tp(p_out, target):
    """Output pixels per tile: a multiple of 128 dividing p_out (lane-dense stores)."""
    if p_out % 128 == 0:
        tp = min(max(target, 128), p_out)
        tp -= tp % 128
        while p_out % tp:
            tp -= 128
        return tp
    return p_out  # tiny / ragged case: single tile (block == full array is legal)


def _im2col_kxm(x_nchw, tp):
    """Build the (K=9*Cin, M=N*H*W) patch matrix, columns ordered (tile, dy, dx, pix).

    Rows are ordered (kh, kw, cin) to match w.transpose(0,2,3,1).reshape(Cout, K).
    Within each tile of 4*tp columns, the 4 members of every 2x2 pool window occupy
    4 contiguous blocks of tp columns, so the pool is an elementwise max in-kernel.
    """
    N, Cin, H, W = x_nchw.shape
    Ho, Wo = H // 2, W // 2
    p_out = N * Ho * Wo
    n_tiles = p_out // tp

    x = jnp.transpose(x_nchw, (0, 2, 3, 1))                  # NHWC
    xp = jnp.pad(x, ((0, 0), (1, 1), (1, 1), (0, 0)))        # pad H,W by 1

    rows = []
    for kh in range(3):
        for kw in range(3):
            s = xp[:, kh:kh + H, kw:kw + W, :]               # (N, H, W, C)
            s = s.reshape(N, Ho, 2, Wo, 2, Cin)              # (n, ph, dy, pw, dx, c)
            s = jnp.transpose(s, (2, 4, 0, 1, 3, 5))         # (dy, dx, n, ph, pw, c)
            s = s.reshape(4, n_tiles, tp, Cin)               # (member, tile, pix, c)
            s = jnp.transpose(s, (3, 1, 0, 2))               # (c, tile, member, pix)
            rows.append(s.reshape(Cin, 4 * p_out))
    return jnp.concatenate(rows, axis=0)                     # (K, M)


def first_transformation(x_nchw, w, b, gamma, beta, *, max_pixels_per_tile=512):
    """x_nchw: (N, 3, H, W) f32; w: (32, 3, 3, 3); b, gamma, beta: (32,). NCHW out."""
    del b  # conv bias cancels exactly under training-mode BatchNorm (dead work)

    N, Cin, H, W = x_nchw.shape
    Cout = w.shape[0]
    assert H % 2 == 0 and W % 2 == 0, "MaxPool2d(2,2) path assumes even H, W"
    Ho, Wo = H // 2, W // 2
    p_out = N * Ho * Wo                 # pooled output pixels
    m_total = 4 * p_out                 # conv positions = BN population (N*H*W)
    K = 9 * Cin

    tp = _choose_tp(p_out, max_pixels_per_tile)
    n_tiles = p_out // tp
    tm = 4 * tp                         # conv positions per tile

    patches = _im2col_kxm(x_nchw, tp)                          # (K, M)
    w_t = jnp.transpose(w, (0, 2, 3, 1)).reshape(Cout, K)      # (Cout, K), (kh,kw,cin)

    w_spec = pl.BlockSpec((Cout, K), lambda t: (0, 0))         # small, stays resident
    p_spec = pl.BlockSpec((K, tm), lambda t: (0, t))           # tiled over M
    c1_spec = pl.BlockSpec((Cout, 1), lambda t: (0, 0))        # per-channel vectors

    # ---- pass 1: per-channel sum / sum-of-squares of the conv output --------------
    sums, ssq = pl.pallas_call(
        conv_stats_kernel,
        out_shape=(jax.ShapeDtypeStruct((Cout, 1), jnp.float32),
                   jax.ShapeDtypeStruct((Cout, 1), jnp.float32)),
        grid=(n_tiles,),
        in_specs=[w_spec, p_spec],
        out_specs=(c1_spec, c1_spec),
        compiler_params=pltpu.CompilerParams(
            dimension_semantics=("arbitrary",),   # resident accumulator across tiles
            vmem_limit_bytes=VMEM_LIMIT),
    )(w_t, patches)

    # Finalize BN (32 channels -> negligible wrapper work). var = E[x^2] - E[x]^2 in
    # f32; clamped at 0 to guard the mild cancellation for very large populations.
    inv_m = 1.0 / float(m_total)
    mean = sums * inv_m
    var = jnp.maximum(ssq * inv_m - mean * mean, 0.0)
    scale = gamma.reshape(Cout, 1) * jax.lax.rsqrt(var + EPS)
    shift = beta.reshape(Cout, 1) - mean * scale

    # ---- pass 2: conv + folded BN + 2x2 max-pool + ReLU6 ---------------------------
    out_cm = pl.pallas_call(
        conv_bn_pool_kernel,
        out_shape=jax.ShapeDtypeStruct((Cout, p_out), jnp.float32),
        grid=(n_tiles,),
        in_specs=[w_spec, p_spec, c1_spec, c1_spec],
        out_specs=pl.BlockSpec((Cout, tp), lambda t: (0, t)),  # lane-dense output tile
        compiler_params=pltpu.CompilerParams(
            dimension_semantics=("parallel",),    # tiles independent -> megacore-safe
            vmem_limit_bytes=VMEM_LIMIT),
    )(w_t, patches, scale, shift)

    # columns are ordered (n, ph, pw); fold the layout back to NCHW
    out = out_cm.reshape(Cout, N, Ho, Wo)
    return jnp.transpose(out, (1, 0, 2, 3))


def reference(x, w, b, gamma, beta):
    """Pure-JAX reference matching the PyTorch forward (training-mode BN)."""
    z = jax.lax.conv_general_dilated(
        x, w, (1, 1), ((1, 1), (1, 1)),
        dimension_numbers=("NCHW", "OIHW", "NCHW"),
        precision=jax.lax.Precision.HIGHEST,
    ) + b[None, :, None, None]
    mean = jnp.mean(z, axis=(0, 2, 3), keepdims=True)
    var = jnp.mean((z - mean) ** 2, axis=(0, 2, 3), keepdims=True)
    y = (z - mean) * jax.lax.rsqrt(var + EPS) * gamma[None, :, None, None] \
        + beta[None, :, None, None]
    y = jnp.clip(y, 0.0, 6.0)
    return jax.lax.reduce_window(y, -jnp.inf, jax.lax.max,
                                 (1, 1, 2, 2), (1, 1, 2, 2), "VALID")


if __name__ == "__main__":
    key = jax.random.PRNGKey(0)
    k_x, k_w, k_b, k_g, k_beta = jax.random.split(key, 5)

    N, Cin, H, W = 4, 3, 16, 16     # module hard-codes 3 input / 32 output channels
    Cout = 32

    x = jax.random.normal(k_x, (N, Cin, H, W), dtype=jnp.float32)
    w = 0.1 * jax.random.normal(k_w, (Cout, Cin, 3, 3), dtype=jnp.float32)
    b = 0.1 * jax.random.normal(k_b, (Cout,), dtype=jnp.float32)
    gamma = 1.0 + 0.1 * jax.random.normal(k_g, (Cout,), dtype=jnp.float32)
    beta = 0.1 * jax.random.normal(k_beta, (Cout,), dtype=jnp.float32)

    # max_pixels_per_tile=128 -> 2 M-tiles at this size, exercising the tiled grid and
    # the cross-tile batch-stat accumulation (production default is 512).
    out = first_transformation(x, w, b, gamma, beta, max_pixels_per_tile=128)
    out = jax.block_until_ready(out)
    assert out.shape == (N, Cout, H // 2, W // 2), out.shape

    ref = jax.block_until_ready(reference(x, w, b, gamma, beta))
    assert jnp.allclose(out, ref, atol=1e-2, rtol=1e-2), float(jnp.max(jnp.abs(out - ref)))

    print("KERNEL_OK")
</pallas_src>

<mosaic_0001>
module attributes {stable_mosaic.version = 11 : i64} {
  func.func @conv_stats_kernel(%arg0: i32, %arg1: memref<32x27xf32, #tpu.memory_space<vmem>>, %arg2: memref<27x512xf32, #tpu.memory_space<vmem>>, %arg3: memref<32x1xf32, #tpu.memory_space<vmem>>, %arg4: memref<32x1xf32, #tpu.memory_space<vmem>>) attributes {dimension_semantics = [#tpu.dimension_semantics<arbitrary>], iteration_bounds = array<i64: 2>, scalar_prefetch = 0 : i64, scratch_operands = 0 : i64, tpu.core_type = #tpu.core_type<tc>, window_params = [{pipeline_mode = #tpu.pipeline_mode<synchronous>, transform_indices = @transform_0, window_bounds = array<i64: 32, 27>}, {transform_indices = @transform_1, window_bounds = array<i64: 27, 512>}, {pipeline_mode = #tpu.pipeline_mode<synchronous>, transform_indices = @transform_2, window_bounds = array<i64: 32, 1>}, {pipeline_mode = #tpu.pipeline_mode<synchronous>, transform_indices = @transform_3, window_bounds = array<i64: 32, 1>}]} {
    %c0 = arith.constant 0 : index
    %c0_0 = arith.constant 0 : index
    %0 = vector.load %arg1[%c0, %c0_0] : memref<32x27xf32, #tpu.memory_space<vmem>>, vector<32x27xf32>
    %c0_1 = arith.constant 0 : index
    %c0_2 = arith.constant 0 : index
    %1 = vector.load %arg2[%c0_1, %c0_2] : memref<27x512xf32, #tpu.memory_space<vmem>>, vector<27x512xf32>
    %cst = arith.constant dense<0.000000e+00> : vector<32x512xf32>
    %2 = tpu.matmul %0, %1, %cst {dimension_numbers = #tpu.dot_dimension_numbers<[1], [0], [0], [1], [0, 0, 1, 1], [], []>} : vector<32x27xf32>, vector<27x512xf32>, vector<32x512xf32> -> vector<32x512xf32>
    %c0_i32 = arith.constant 0 : i32
    %3 = arith.cmpi eq, %arg0, %c0_i32 : i32
    %4 = arith.extui %3 : i1 to i32
    %c0_i32_3 = arith.constant 0 : i32
    %5 = arith.cmpi ne, %4, %c0_i32_3 : i32
    scf.if %5 {
      %cst_14 = arith.constant 0.000000e+00 : f32
      %17 = vector.broadcast %cst_14 : f32 to vector<32x1xf32>
      %c0_15 = arith.constant 0 : index
      %c0_16 = arith.constant 0 : index
      %18 = vector.load %arg3[%c0_15, %c0_16] : memref<32x1xf32, #tpu.memory_space<vmem>>, vector<32x1xf32>
      tpu.vector_store %arg3[%c0_15, %c0_16], %17 {strides = array<i32>} : memref<32x1xf32, #tpu.memory_space<vmem>>, vector<32x1xf32>,
      %cst_17 = arith.constant 0.000000e+00 : f32
      %19 = vector.broadcast %cst_17 : f32 to vector<32x1xf32>
      %c0_18 = arith.constant 0 : index
      %c0_19 = arith.constant 0 : index
      %20 = vector.load %arg4[%c0_18, %c0_19] : memref<32x1xf32, #tpu.memory_space<vmem>>, vector<32x1xf32>
      tpu.vector_store %arg4[%c0_18, %c0_19], %19 {strides = array<i32>} : memref<32x1xf32, #tpu.memory_space<vmem>>, vector<32x1xf32>,
    } else {
    }
    %c0_4 = arith.constant 0 : index
    %c0_5 = arith.constant 0 : index
    %6 = vector.load %arg3[%c0_4, %c0_5] : memref<32x1xf32, #tpu.memory_space<vmem>>, vector<32x1xf32>
    %cst_6 = arith.constant dense<0.000000e+00> : vector<32xf32>
    %7 = vector.multi_reduction <add>, %2, %cst_6 [1] : vector<32x512xf32> to vector<32xf32>
    %8 = vector.shape_cast %7 : vector<32xf32> to vector<32x1xf32>
    %9 = arith.addf %6, %8 : vector<32x1xf32>
    %c0_7 = arith.constant 0 : index
    %c0_8 = arith.constant 0 : index
    %10 = vector.load %arg3[%c0_7, %c0_8] : memref<32x1xf32, #tpu.memory_space<vmem>>, vector<32x1xf32>
    tpu.vector_store %arg3[%c0_7, %c0_8], %9 {strides = array<i32>} : memref<32x1xf32, #tpu.memory_space<vmem>>, vector<32x1xf32>,
    %c0_9 = arith.constant 0 : index
    %c0_10 = arith.constant 0 : index
    %11 = vector.load %arg4[%c0_9, %c0_10] : memref<32x1xf32, #tpu.memory_space<vmem>>, vector<32x1xf32>
    %12 = arith.mulf %2, %2 : vector<32x512xf32>
    %cst_11 = arith.constant dense<0.000000e+00> : vector<32xf32>
    %13 = vector.multi_reduction <add>, %12, %cst_11 [1] : vector<32x512xf32> to vector<32xf32>
    %14 = vector.shape_cast %13 : vector<32xf32> to vector<32x1xf32>
    %15 = arith.addf %11, %14 : vector<32x1xf32>
    %c0_12 = arith.constant 0 : index
    %c0_13 = arith.constant 0 : index
    %16 = vector.load %arg4[%c0_12, %c0_13] : memref<32x1xf32, #tpu.memory_space<vmem>>, vector<32x1xf32>
    tpu.vector_store %arg4[%c0_12, %c0_13], %15 {strides = array<i32>} : memref<32x1xf32, #tpu.memory_space<vmem>>, vector<32x1xf32>,
    return
  }
  func.func @transform_0(%arg0: i32) -> (i32, i32) {
    %c0_i32 = arith.constant 0 : i32
    %c0_i32_0 = arith.constant 0 : i32
    %c0_i32_1 = arith.constant 0 : i32
    return %c0_i32, %c0_i32_0 : i32, i32
  }
  func.func @transform_1(%arg0: i32) -> (i32, i32) {
    %c0_i32 = arith.constant 0 : i32
    %c0_i32_0 = arith.constant 0 : i32
    return %c0_i32, %arg0 : i32, i32
  }
  func.func @transform_2(%arg0: i32) -> (i32, i32) {
    %c0_i32 = arith.constant 0 : i32
    %c0_i32_0 = arith.constant 0 : i32
    %c0_i32_1 = arith.constant 0 : i32
    return %c0_i32, %c0_i32_0 : i32, i32
  }
  func.func @transform_3(%arg0: i32) -> (i32, i32) {
    %c0_i32 = arith.constant 0 : i32
    %c0_i32_0 = arith.constant 0 : i32
    %c0_i32_1 = arith.constant 0 : i32
    return %c0_i32, %c0_i32_0 : i32, i32
  }
}

</mosaic_0001>

<llo_original>
// kernel: tpu_custom_call.1
$region0: #{tpu_custom_call.1}
  #allocation0 [shape = 'u32[]', space=smem, size = 0x4, offset = 0x4, fixed_abs, tag = 'smem constant byte address 0x4 - core index']
  #allocation1 [shape = 'u32[144,128]{1,0:T(1,128)}', space=vmem, size = 0x12000, scoped, tag = 'internal scratch']
  %s0 = inlined_call_operand.hbm [shape: f32[32,27], index: 0, kind: input, shape index: {}]
  %s1 = inlined_call_operand.hbm [shape: f32[27,1024], index: 1, kind: input, shape index: {}]
  %s2 = inlined_call_operand.vmem [shape: f32[32,1], index: 2, kind: output, shape index: {0}]
  %s3 = inlined_call_operand.vmem [shape: f32[32,1], index: 3, kind: output, shape index: {1}]
  %4 = xla_tuple %s2, %s3
  %s5 = sld [smem:[#allocation0]]
  $region61: #{tpu_custom_call.1} parent=0
    _
  %s7 = ssub.s32 1, %s5
  %s8 = scalar_select 0, %s7, %s5
  $region1: #{tpu_custom_call.1} parent=0
    #allocation2 [shape = 'u8[16384]{0}', space=vmem, size = 0x4000, scoped, tag = 'input window, operand 0, single buffered']
    #allocation3 [shape = 's32[2]{0}', space=sflag, size = 0x8, scoped, tag = 'scoped memory for tpu_custom_call.1']
    #allocation4 [shape = 'u8[131072]{0}', space=vmem, size = 0x20000, scoped, tag = 'input window, operand 1']
    #allocation5 [shape = 's32[2]{0}', space=sflag, size = 0x8, scoped, tag = 'scoped memory for tpu_custom_call.1']
    %9 = vsyncpa [#allocation3], 0
    %10 = vsyncpa [#allocation5], 0
    %s11 = scalar_lea.sflag [#allocation5], 1
    %12 = vsyncpa %s11, 0
    loop: start=0, step=1, limit=4
    $region2: #{tpu_custom_call.1} parent=1 // loop_pre_header
      _
    $region3: #{tpu_custom_call.1} parent=1 // loop_header
      %s14 = sphi 0, %s18
      %p15 = scmp.ge.s32.totalorder %s14, 4
      %s22 = sphi 0, %s22
      %s24 = sphi 0, %s22
      %s25 = sphi 0, %s24
      %s39 = sphi 0, %s25
      %s45 = sphi 0, %s47
      %s48 = sphi 0, %s45
      %s49 = sphi 0, %s48
      %s65 = sphi 0, %s49
      %s69 = sphi 0, %s69
      %s71 = sphi 0, %s69
      %s72 = sphi 0, %s71
      %s86 = sphi 0, %s72
      %s90 = sphi 0, %s90
      %s92 = sphi 0, %s90
      %s93 = sphi 0, %s92
      %s107 = sphi 0, %s93
    $region4: #{tpu_custom_call.1} parent=1 // loop_header_branch
      %17 = sbr.rel (%p15) target = $region8
    $region5: #{tpu_custom_call.1} parent=1 // loop_body
      %s19 = ssub.s32 %s14, 1
      %s20 = ssub.s32 %s14, 2
      %s21 = sadd.s32 %s14, 1
      %s23 = sadd.s32 %s22, 1
      %p26 = scmp.eq.s32.totalorder %s14, 1
      %p27 = scmp.ne.s32.totalorder %s22, %s24
      %p28 = scmp.eq.s32.totalorder %s14, 0
      %p29 = por %p27, %p28
      %p30 = scmp.ne.s32.totalorder %s22, %s24
      %p31 = scmp.eq.s32.totalorder %s19, 1
      %p32 = por %p30, %p31
      %p33 = scmp.ne.s32.totalorder %s24, %s25
      %p34 = scmp.eq.s32.totalorder %s19, 0
      %p35 = por %p33, %p34
      %p36 = scmp.ne.s32.totalorder %s24, %s25
      %p37 = scmp.eq.s32.totalorder %s20, 1
      %p38 = por %p36, %p37
      %p40 = scmp.ne.s32.totalorder %s25, %s39
      %p41 = scmp.eq.s32.totalorder %s20, 0
      %p42 = por %p40, %p41
      %s43 = ssub.s32 %s14, %s21
      %p44 = scmp.eq.s32.totalorder %s43, 0
      %s46 = sadd.s32 %s45, 1
      %s47 = scalar_select %p44, %s45, %s46
      %p50 = pneg %p44
      %p51 = scmp.eq.s32.totalorder %s14, 1
      %p52 = por %p50, %p51
      %p53 = scmp.ne.s32.totalorder %s45, %s48
      %p54 = scmp.eq.s32.totalorder %s14, 0
      %p55 = por %p53, %p54
      %p56 = scmp.ne.s32.totalorder %s45, %s48
      %p57 = scmp.eq.s32.totalorder %s19, 1
      %p58 = por %p56, %p57
      %p59 = scmp.ne.s32.totalorder %s48, %s49
      %p60 = scmp.eq.s32.totalorder %s19, 0
      %p61 = por %p59, %p60
      %p62 = scmp.ne.s32.totalorder %s48, %s49
      %p63 = scmp.eq.s32.totalorder %s20, 1
      %p64 = por %p62, %p63
      %p66 = scmp.ne.s32.totalorder %s49, %s65
      %p67 = scmp.eq.s32.totalorder %s20, 0
      %p68 = por %p66, %p67
      %s70 = sadd.s32 %s69, 1
      %p73 = scmp.eq.s32.totalorder %s14, 1
      %p74 = scmp.ne.s32.totalorder %s69, %s71
      %p75 = scmp.eq.s32.totalorder %s14, 0
      %p76 = por %p74, %p75
      %p77 = scmp.ne.s32.totalorder %s69, %s71
      %p78 = scmp.eq.s32.totalorder %s19, 1
      %p79 = por %p77, %p78
      %p80 = scmp.ne.s32.totalorder %s71, %s72
      %p81 = scmp.eq.s32.totalorder %s19, 0
      %p82 = por %p80, %p81
      %p83 = scmp.ne.s32.totalorder %s71, %s72
      %p84 = scmp.eq.s32.totalorder %s20, 1
      %p85 = por %p83, %p84
      %p87 = scmp.ne.s32.totalorder %s72, %s86
      %p88 = scmp.eq.s32.totalorder %s20, 0
      %p89 = por %p87, %p88
      %s91 = sadd.s32 %s90, 1
      %p94 = scmp.eq.s32.totalorder %s14, 1
      %p95 = scmp.ne.s32.totalorder %s90, %s92
      %p96 = scmp.eq.s32.totalorder %s14, 0
      %p97 = por %p95, %p96
      %p98 = scmp.ne.s32.totalorder %s90, %s92
      %p99 = scmp.eq.s32.totalorder %s19, 1
      %p100 = por %p98, %p99
      %p101 = scmp.ne.s32.totalorder %s92, %s93
      %p102 = scmp.eq.s32.totalorder %s19, 0
      %p103 = por %p101, %p102
      %p104 = scmp.ne.s32.totalorder %s92, %s93
      %p105 = scmp.eq.s32.totalorder %s20, 1
      %p106 = por %p104, %p105
      %p108 = scmp.ne.s32.totalorder %s93, %s107
      %p109 = scmp.eq.s32.totalorder %s20, 0
      %p110 = por %p108, %p109
      %p111 = scmp.le.s32.totalorder 1, %s14
      %p112 = scmp.lt.s32.totalorder %s14, 3
      %p113 = pnand %p111, %p112
      %p114 = pneg %p113
      // Predicated region
      $region9: #{tpu_custom_call.1} parent=5 // pred_check
        _
      $region10: #{tpu_custom_call.1} parent=5 // pred_check_branch
        %116 = sbr.rel (%p113) target = $region12
      $region11: #{tpu_custom_call.1} parent=5 // pred_region
        %s117 = ssub.s32 %s14, 1
        // Predicated region
        $region13: #{tpu_custom_call.1} parent=11 // pred_check
          %p118 = pneg %p35
        $region14: #{tpu_custom_call.1} parent=11 // pred_check_branch
          %120 = sbr.rel (%p118) target = $region16
        $region15: #{tpu_custom_call.1} parent=11 // pred_region
          %s122 = ssub.s32 512, 512
          %123 = vsyncadd [#allocation3], %s122
          %s124 = sshll.u32 [#allocation2], 4
          %s125 = int_to_ptr.vmem [resolvable:$true] %s124
          %130 = dma.hbm_to_vmem [thread:$0]  %s0, 512, %s125, [#allocation3], 128, 128, 8
        $region16: #{tpu_custom_call.1} parent=11 // pred_fallthru
          _
      $region12: #{tpu_custom_call.1} parent=5 // pred_fallthru
        _
      %p131 = scmp.lt.s32.totalorder %s14, 2
      // Predicated region
      $region17: #{tpu_custom_call.1} parent=5 // pred_check
        %p132 = pneg %p131
      $region18: #{tpu_custom_call.1} parent=5 // pred_check_branch
        %134 = sbr.rel (%p132) target = $region20
      $region19: #{tpu_custom_call.1} parent=5 // pred_region
        // Predicated region
        $region21: #{tpu_custom_call.1} parent=19 // pred_check
          %p135 = pneg %p55
        $region22: #{tpu_custom_call.1} parent=19 // pred_check_branch
          %137 = sbr.rel (%p135) target = $region24
        $region23: #{tpu_custom_call.1} parent=19 // pred_region
          %s138 = sand.u32 %s45, 1
          %s139 = scalar_lea.sflag [#allocation5], %s138
          %s140 = sand.u32 %s45, 1
          %s141 = smul.addr %s140, 128
          %s142 = scalar_lea.vmem [#allocation4], %s141
          %s143 = smul.u32 4, %s14
          %s145 = ssub.s32 2048, 2048
          %146 = vsyncadd %s139, %s145
          %s147 = smul.addr %s143, 128
          %s148 = scalar_lea.hbm %s1, %s147
          %s149 = sshll.u32 %s142, 4
          %s150 = int_to_ptr.vmem [resolvable:$true] %s149
          %155 = dma.hbm_to_vmem [thread:$0]  %s148, 2048, %s150, %s139, 1024, 512, 32
        $region24: #{tpu_custom_call.1} parent=19 // pred_fallthru
          _
      $region20: #{tpu_custom_call.1} parent=5 // pred_fallthru
        _
      %p156 = scmp.le.s32.totalorder 1, %s14
      %p157 = scmp.lt.s32.totalorder %s14, 3
      %p158 = pnand %p156, %p157
      %p159 = pneg %p158
      // Predicated region
      $region25: #{tpu_custom_call.1} parent=5 // pred_check
        _
      $region26: #{tpu_custom_call.1} parent=5 // pred_check_branch
        %161 = sbr.rel (%p158) target = $region28
      $region27: #{tpu_custom_call.1} parent=5 // pred_region
        %s162 = ssub.s32 %s14, 1
        // Predicated region
        $region29: #{tpu_custom_call.1} parent=27 // pred_check
          %p163 = pneg %p35
        $region30: #{tpu_custom_call.1} parent=27 // pred_check_branch
          %165 = sbr.rel (%p163) target = $region32
        $region31: #{tpu_custom_call.1} parent=27 // pred_region
          %166 = dma.done [#allocation3], 512
        $region32: #{tpu_custom_call.1} parent=27 // pred_fallthru
          _
        %s167 = sand.u32 %s48, 1
        %s168 = scalar_lea.sflag [#allocation5], %s167
        %s169 = sand.u32 %s48, 1
        %s170 = smul.addr %s169, 128
        %s171 = scalar_lea.vmem [#allocation4], %s170
        // Predicated region
        $region33: #{tpu_custom_call.1} parent=27 // pred_check
          %p172 = pneg %p61
        $region34: #{tpu_custom_call.1} parent=27 // pred_check_branch
          %174 = sbr.rel (%p172) target = $region36
        $region35: #{tpu_custom_call.1} parent=27 // pred_region
          %175 = dma.done %s168, 2048
        $region36: #{tpu_custom_call.1} parent=27 // pred_fallthru
          _
        %p176 = pneg %p35
        %p177 = pneg %p32
        %s178 = sand.u32 %s48, 1
        %s179 = scalar_lea.sflag [#allocation5], %s178
        %s180 = sand.u32 %s48, 1
        %s181 = smul.addr %s180, 128
        %s182 = scalar_lea.vmem [#allocation4], %s181
        %p183 = pneg %p61
        %p184 = pneg %p58
        %p185 = pneg %p82
        %p186 = pneg %p79
        %p187 = pneg %p103
        %p188 = pneg %p100
        %s189 = smul.u32 4, %s19
        %v190 = vld [vmem:[#allocation2] sm:$0xff]
        %v191 = vld [vmem:[#allocation2 + $0x8] sm:$0xff]
        %v192 = vld [vmem:[#allocation2 + $0x10] sm:$0xff]
        %v193 = vld [vmem:[#allocation2 + $0x18] sm:$0xff]
        %v194 = vld [vmem:[%s171] sm:$0xff]
        %v195 = vld [vmem:[%s171 + $0x8] sm:$0xff]
        %v196 = vld [vmem:[%s171 + $0x10] sm:$0xff]
        %v197 = vld [vmem:[%s171 + $0x18] sm:$0xff]
        %v198 = vld [vmem:[%s171 + $0x20] sm:$0xff]
        %v199 = vld [vmem:[%s171 + $0x28] sm:$0xff]
        %v200 = vld [vmem:[%s171 + $0x30] sm:$0xff]
        %v201 = vld [vmem:[%s171 + $0x38] sm:$0xff]
        %v202 = vld [vmem:[%s171 + $0x40] sm:$0xff]
        %v203 = vld [vmem:[%s171 + $0x48] sm:$0xff]
        %v204 = vld [vmem:[%s171 + $0x50] sm:$0xff]
        %v205 = vld [vmem:[%s171 + $0x58] sm:$0xff]
        %v206 = vld [vmem:[%s171 + $0x60] sm:$0x7]
        %v207 = vld [vmem:[%s171 + $0x68] sm:$0x7]
        %v208 = vld [vmem:[%s171 + $0x70] sm:$0x7]
        %v209 = vld [vmem:[%s171 + $0x78] sm:$0x7]
        %vm210 = vcmask 220160
        %v212 = vsel %vm210, %v190, 0
        %v215 = vsel %vm210, %v191, 0
        %v218 = vsel %vm210, %v192, 0
        %v221 = vsel %vm210, %v193, 0
        %vm223 = vcmask 1042432
        %v225 = vsel %vm223, %v206, 0
        %v228 = vsel %vm223, %v207, 0
        %v231 = vsel %vm223, %v208, 0
        %v234 = vsel %vm223, %v209, 0
        %236 = vmatprep.subr.mxu0 %v195
        %237 = vmatpush1.msra.mxu0 %v194
        %238 = vmatprep.subr.mxu0 %v199
        %239 = vmatpush1.msra.mxu0 %v198
        %240 = vmatprep.subr.mxu0 %v203
        %241 = vmatpush1.msra.mxu0 %v202
        %242 = vmatprep.subr.mxu0 %v228
        %243 = vmatpush1.msra.mxu0 %v225
        %244 = vmatprep.subr.mxu0 0.0
        %245 = vmatpush1.msra.mxu0 0.0
        %246 = vmatprep.subr.mxu0 0.0
        %247 = vmatpush1.msra.mxu0 0.0
        %248 = vmatprep.subr.mxu0 0.0
        %249 = vmatpush1.msra.mxu0 0.0
        %250 = vmatprep.subr.mxu0 0.0
        %251 = vmatpush1.msra.mxu0 0.0
        %252 = vmatprep.subr.mxu0 0.0
        %253 = vmatpush1.msra.mxu0 0.0
        %254 = vmatprep.subr.mxu0 0.0
        %255 = vmatpush1.msra.mxu0 0.0
        %256 = vmatprep.subr.mxu0 0.0
        %257 = vmatpush1.msra.mxu0 0.0
        %258 = vmatprep.subr.mxu0 0.0
        %259 = vmatpush1.msra.mxu0 0.0
        %260 = vmatprep.subr.mxu0 0.0
        %261 = vmatpush1.msra.mxu0 0.0
        %262 = vmatprep.subr.mxu0 0.0
        %263 = vmatpush1.msra.mxu0 0.0
        %264 = vmatprep.subr.mxu0 0.0
        %265 = vmatpush1.msra.mxu0 0.0
        %266 = vmatprep.subr.mxu0 0.0
        %267 = vmatpush1.msra.mxu0 0.0
        %268 = vmatprep.subr.mxu0 0.0
        %269 = vmatpush1.msra.mxu0 0.0
        %270 = vmatprep.subr.mxu0 0.0
        %271 = vmatpush1.msra.mxu0 0.0
        %272 = vmatprep.subr.mxu0 0.0
        %273 = vmatpush1.msra.mxu0 0.0
        %274 = vmatprep.subr.mxu0 0.0
        %275 = vmatpush1.msra.mxu0 0.0
        %276 = vmatprep.subr.mxu0 0.0
        %277 = vmatpush1.msra.mxu0 0.0
        %278 = vmatprep.subr.mxu0 0.0
        %279 = vmatpush1.msra.mxu0 0.0
        %280 = vmatprep.subr.mxu0 0.0
        %281 = vmatpush1.msra.mxu0 0.0
        %282 = vmatprep.subr.mxu0 0.0
        %283 = vmatpush1.msra.mxu0 0.0
        %284 = vmatprep.subr.mxu0 0.0
        %285 = vmatpush1.msra.mxu0 0.0
        %286 = vmatprep.subr.mxu0 0.0
        %287 = vmatpush1.msra.mxu0 0.0
        %288 = vmatprep.subr.mxu0 0.0
        %289 = vmatpush1.msra.mxu0 0.0
        %290 = vmatprep.subr.mxu0 0.0
        %291 = vmatpush1.msra.mxu0 0.0
        %292 = vmatprep.subr.mxu0 0.0
        %293 = vmatpush1.msra.mxu0 0.0
        %294 = vmatprep.subr.mxu0 0.0
        %295 = vmatpush1.msra.mxu0 0.0
        %296 = vmatprep.subr.mxu0 0.0
        %297 = vmatpush1.msra.mxu0 0.0
        %298 = vmatprep.subr.mxu0 0.0
        %299 = vmatpush1.msra.mxu0 0.0
        %300 = vmatprep.mubr.f32.mxu0 0.0
        %301 = vmatmul.mubr.f32.gmra.mrb[0].mxu0 %v212
        %v302 = vpop.f32.mrb[0].mxu0
        %v303 = vadd.f32 0.0, %v302
        %v304 = vpop.f32.mrb[0].mxu0
        %v305 = vadd.f32 0.0, %v304
        %306 = vmatprep.mubr.f32.mxu0 0.0
        %307 = vmatmul.mubr.f32.gmra.mrb[0].mxu0 %v215
        %v308 = vpop.f32.mrb[0].mxu0
        %v309 = vadd.f32 0.0, %v308
        %v310 = vpop.f32.mrb[0].mxu0
        %v311 = vadd.f32 0.0, %v310
        %312 = vmatprep.mubr.f32.mxu0 0.0
        %313 = vmatmul.mubr.f32.gmra.mrb[0].mxu0 %v218
        %v314 = vpop.f32.mrb[0].mxu0
        %v315 = vadd.f32 0.0, %v314
        %v316 = vpop.f32.mrb[0].mxu0
        %v317 = vadd.f32 0.0, %v316
        %318 = vmatprep.mubr.f32.mxu0 0.0
        %319 = vmatmul.mubr.f32.gmra.mrb[0].mxu0 %v221
        %v320 = vpop.f32.mrb[0].mxu0
        %v321 = vadd.f32 0.0, %v320
        %v322 = vpop.f32.mrb[0].mxu0
        %v323 = vadd.f32 0.0, %v322
        %324 = vdwg.mxu0
        %325 = vmatprep.subr.mxu0 %v197
        %326 = vmatpush1.msra.mxu0 %v196
        %327 = vmatprep.subr.mxu0 %v201
        %328 = vmatpush1.msra.mxu0 %v200
        %329 = vmatprep.subr.mxu0 %v205
        %330 = vmatpush1.msra.mxu0 %v204
        %331 = vmatprep.subr.mxu0 %v234
        %332 = vmatpush1.msra.mxu0 %v231
        %333 = vmatprep.subr.mxu0 0.0
        %334 = vmatpush1.msra.mxu0 0.0
        %335 = vmatprep.subr.mxu0 0.0
        %336 = vmatpush1.msra.mxu0 0.0
        %337 = vmatprep.subr.mxu0 0.0
        %338 = vmatpush1.msra.mxu0 0.0
        %339 = vmatprep.subr.mxu0 0.0
        %340 = vmatpush1.msra.mxu0 0.0
        %341 = vmatprep.subr.mxu0 0.0
        %342 = vmatpush1.msra.mxu0 0.0
        %343 = vmatprep.subr.mxu0 0.0
        %344 = vmatpush1.msra.mxu0 0.0
        %345 = vmatprep.subr.mxu0 0.0
        %346 = vmatpush1.msra.mxu0 0.0
        %347 = vmatprep.subr.mxu0 0.0
        %348 = vmatpush1.msra.mxu0 0.0
        %349 = vmatprep.subr.mxu0 0.0
        %350 = vmatpush1.msra.mxu0 0.0
        %351 = vmatprep.subr.mxu0 0.0
        %352 = vmatpush1.msra.mxu0 0.0
        %353 = vmatprep.subr.mxu0 0.0
        %354 = vmatpush1.msra.mxu0 0.0
        %355 = vmatprep.subr.mxu0 0.0
        %356 = vmatpush1.msra.mxu0 0.0
        %357 = vmatprep.subr.mxu0 0.0
        %358 = vmatpush1.msra.mxu0 0.0
        %359 = vmatprep.subr.mxu0 0.0
        %360 = vmatpush1.msra.mxu0 0.0
        %361 = vmatprep.subr.mxu0 0.0
        %362 = vmatpush1.msra.mxu0 0.0
        %363 = vmatprep.subr.mxu0 0.0
        %364 = vmatpush1.msra.mxu0 0.0
        %365 = vmatprep.subr.mxu0 0.0
        %366 = vmatpush1.msra.mxu0 0.0
        %367 = vmatprep.subr.mxu0 0.0
        %368 = vmatpush1.msra.mxu0 0.0
        %369 = vmatprep.subr.mxu0 0.0
        %370 = vmatpush1.msra.mxu0 0.0
        %371 = vmatprep.subr.mxu0 0.0
        %372 = vmatpush1.msra.mxu0 0.0
        %373 = vmatprep.subr.mxu0 0.0
        %374 = vmatpush1.msra.mxu0 0.0
        %375 = vmatprep.subr.mxu0 0.0
        %376 = vmatpush1.msra.mxu0 0.0
        %377 = vmatprep.subr.mxu0 0.0
        %378 = vmatpush1.msra.mxu0 0.0
        %379 = vmatprep.subr.mxu0 0.0
        %380 = vmatpush1.msra.mxu0 0.0
        %381 = vmatprep.subr.mxu0 0.0
        %382 = vmatpush1.msra.mxu0 0.0
        %383 = vmatprep.subr.mxu0 0.0
        %384 = vmatpush1.msra.mxu0 0.0
        %385 = vmatprep.subr.mxu0 0.0
        %386 = vmatpush1.msra.mxu0 0.0
        %387 = vmatprep.subr.mxu0 0.0
        %388 = vmatpush1.msra.mxu0 0.0
        %389 = vmatprep.mubr.f32.mxu0 0.0
        %390 = vmatmul.mubr.f32.gmra.mrb[0].mxu0 %v212
        %v391 = vpop.f32.mrb[0].mxu0
        %v392 = vadd.f32 0.0, %v391
        %v393 = vpop.f32.mrb[0].mxu0
        %v394 = vadd.f32 0.0, %v393
        %395 = vmatprep.mubr.f32.mxu0 0.0
        %396 = vmatmul.mubr.f32.gmra.mrb[0].mxu0 %v215
        %v397 = vpop.f32.mrb[0].mxu0
        %v398 = vadd.f32 0.0, %v397
        %v399 = vpop.f32.mrb[0].mxu0
        %v400 = vadd.f32 0.0, %v399
        %401 = vmatprep.mubr.f32.mxu0 0.0
        %402 = vmatmul.mubr.f32.gmra.mrb[0].mxu0 %v218
        %v403 = vpop.f32.mrb[0].mxu0
        %v404 = vadd.f32 0.0, %v403
        %v405 = vpop.f32.mrb[0].mxu0
        %v406 = vadd.f32 0.0, %v405
        %407 = vmatprep.mubr.f32.mxu0 0.0
        %408 = vmatmul.mubr.f32.gmra.mrb[0].mxu0 %v221
        %v409 = vpop.f32.mrb[0].mxu0
        %v410 = vadd.f32 0.0, %v409
        %v411 = vpop.f32.mrb[0].mxu0
        %v412 = vadd.f32 0.0, %v411
        %413 = vdwg.mxu0
        %p414 = scmp.eq.s32.totalorder %s19, 0
        // Predicated region
        $region37: #{tpu_custom_call.1} parent=27 // pred_check
          %p415 = pneg %p414
        $region38: #{tpu_custom_call.1} parent=27 // pred_check_branch
          %417 = sbr.rel (%p415) target = $region40
        $region39: #{tpu_custom_call.1} parent=27 // pred_region
          %vm418 = vcmask 7168
          %419 = vst.msk [vmem:[%s2] sm:$0xff] %vm418, 0.0
          %420 = vst.msk [vmem:[%s2 + $0x8] sm:$0xff] %vm418, 0.0
          %421 = vst.msk [vmem:[%s2 + $0x10] sm:$0xff] %vm418, 0.0
          %422 = vst.msk [vmem:[%s2 + $0x18] sm:$0xff] %vm418, 0.0
          %423 = vst.msk [vmem:[%s3] sm:$0xff] %vm418, 0.0
          %424 = vst.msk [vmem:[%s3 + $0x8] sm:$0xff] %vm418, 0.0
          %425 = vst.msk [vmem:[%s3 + $0x10] sm:$0xff] %vm418, 0.0
          %426 = vst.msk [vmem:[%s3 + $0x18] sm:$0xff] %vm418, 0.0
        $region40: #{tpu_custom_call.1} parent=27 // pred_fallthru
          _
        %v427 = vld [vmem:[%s2] sm:$0xff]
        %v428 = vld [vmem:[%s2 + $0x8] sm:$0xff]
        %v429 = vld [vmem:[%s2 + $0x10] sm:$0xff]
        %v430 = vld [vmem:[%s2 + $0x18] sm:$0xff]
        %v431 = vadd.f32 %v303, %v305
        %v432 = vadd.f32 %v431, %v392
        %v433 = vadd.f32 %v432, %v394
        %434 = vadd.xlane.f32.xlu0 %v433
        %v435 = vpop.xlane.xlu0 %434
        %v436 = vadd.f32 %v309, %v311
        %v437 = vadd.f32 %v436, %v398
        %v438 = vadd.f32 %v437, %v400
        %439 = vadd.xlane.f32.xlu0 %v438
        %v440 = vpop.xlane.xlu0 %439
        %v441 = vadd.f32 %v315, %v317
        %v442 = vadd.f32 %v441, %v404
        %v443 = vadd.f32 %v442, %v406
        %444 = vadd.xlane.f32.xlu0 %v443
        %v445 = vpop.xlane.xlu0 %444
        %v446 = vadd.f32 %v321, %v323
        %v447 = vadd.f32 %v446, %v410
        %v448 = vadd.f32 %v447, %v412
        %449 = vadd.xlane.f32.xlu0 %v448
        %v450 = vpop.xlane.xlu0 %449
        %v451 = vadd.f32 %v427, %v435
        %v452 = vadd.f32 %v428, %v440
        %v453 = vadd.f32 %v429, %v445
        %v454 = vadd.f32 %v430, %v450
        %vm455 = vcmask 7168
        %456 = vst.msk [vmem:[%s2] sm:$0xff] %vm455, %v451
        %457 = vst.msk [vmem:[%s2 + $0x8] sm:$0xff] %vm455, %v452
        %458 = vst.msk [vmem:[%s2 + $0x10] sm:$0xff] %vm455, %v453
        %459 = vst.msk [vmem:[%s2 + $0x18] sm:$0xff] %vm455, %v454
        %v460 = vld [vmem:[%s3] sm:$0xff]
        %v461 = vld [vmem:[%s3 + $0x8] sm:$0xff]
        %v462 = vld [vmem:[%s3 + $0x10] sm:$0xff]
        %v463 = vld [vmem:[%s3 + $0x18] sm:$0xff]
        %v464 = vmul.f32 %v303, %v303
        %v465 = vmul.f32 %v305, %v305
        %v466 = vmul.f32 %v392, %v392
        %v467 = vmul.f32 %v394, %v394
        %v468 = vmul.f32 %v309, %v309
        %v469 = vmul.f32 %v311, %v311
        %v470 = vmul.f32 %v398, %v398
        %v471 = vmul.f32 %v400, %v400
        %v472 = vmul.f32 %v315, %v315
        %v473 = vmul.f32 %v317, %v317
        %v474 = vmul.f32 %v404, %v404
        %v475 = vmul.f32 %v406, %v406
        %v476 = vmul.f32 %v321, %v321
        %v477 = vmul.f32 %v323, %v323
        %v478 = vmul.f32 %v410, %v410
        %v479 = vmul.f32 %v412, %v412
        %v480 = vadd.f32 %v464, %v465
        %v481 = vadd.f32 %v480, %v466
        %v482 = vadd.f32 %v481, %v467
        %483 = vadd.xlane.f32.xlu0 %v482
        %v484 = vpop.xlane.xlu0 %483
        %v485 = vadd.f32 %v468, %v469
        %v486 = vadd.f32 %v485, %v470
        %v487 = vadd.f32 %v486, %v471
        %488 = vadd.xlane.f32.xlu0 %v487
        %v489 = vpop.xlane.xlu0 %488
        %v490 = vadd.f32 %v472, %v473
        %v491 = vadd.f32 %v490, %v474
        %v492 = vadd.f32 %v491, %v475
        %493 = vadd.xlane.f32.xlu0 %v492
        %v494 = vpop.xlane.xlu0 %493
        %v495 = vadd.f32 %v476, %v477
        %v496 = vadd.f32 %v495, %v478
        %v497 = vadd.f32 %v496, %v479
        %498 = vadd.xlane.f32.xlu0 %v497
        %v499 = vpop.xlane.xlu0 %498
        %v500 = vadd.f32 %v460, %v484
        %v501 = vadd.f32 %v461, %v489
        %v502 = vadd.f32 %v462, %v494
        %v503 = vadd.f32 %v463, %v499
        %504 = vst.msk [vmem:[%s3] sm:$0xff] %vm455, %v500
        %505 = vst.msk [vmem:[%s3 + $0x8] sm:$0xff] %vm455, %v501
        %506 = vst.msk [vmem:[%s3 + $0x10] sm:$0xff] %vm455, %v502
        %507 = vst.msk [vmem:[%s3 + $0x18] sm:$0xff] %vm455, %v503
        // Predicated region
        $region41: #{tpu_custom_call.1} parent=27 // pred_check
          %p508 = pneg %p79
        $region42: #{tpu_custom_call.1} parent=27 // pred_check_branch
          %510 = sbr.rel (%p508) target = $region44
        $region43: #{tpu_custom_call.1} parent=27 // pred_region
          _
        $region44: #{tpu_custom_call.1} parent=27 // pred_fallthru
          _
        // Predicated region
        $region45: #{tpu_custom_call.1} parent=27 // pred_check
          %p511 = pneg %p100
        $region46: #{tpu_custom_call.1} parent=27 // pred_check_branch
          %513 = sbr.rel (%p511) target = $region48
        $region47: #{tpu_custom_call.1} parent=27 // pred_region
          _
        $region48: #{tpu_custom_call.1} parent=27 // pred_fallthru
          _
        // Predicated region
        $region49: #{tpu_custom_call.1} parent=27 // pred_check
          %p514 = pneg %p79
        $region50: #{tpu_custom_call.1} parent=27 // pred_check_branch
          %516 = sbr.rel (%p514) target = $region52
        $region51: #{tpu_custom_call.1} parent=27 // pred_region
          _
        $region52: #{tpu_custom_call.1} parent=27 // pred_fallthru
          _
        // Predicated region
        $region53: #{tpu_custom_call.1} parent=27 // pred_check
          %p517 = pneg %p100
        $region54: #{tpu_custom_call.1} parent=27 // pred_check_branch
          %519 = sbr.rel (%p517) target = $region56
        $region55: #{tpu_custom_call.1} parent=27 // pred_region
          _
        $region56: #{tpu_custom_call.1} parent=27 // pred_fallthru
          _
      $region28: #{tpu_custom_call.1} parent=5 // pred_fallthru
        _
      %p520 = scmp.le.s32.totalorder 2, %s14
      // Predicated region
      $region57: #{tpu_custom_call.1} parent=5 // pred_check
        %p521 = pneg %p520
      $region58: #{tpu_custom_call.1} parent=5 // pred_check_branch
        %523 = sbr.rel (%p521) target = $region60
      $region59: #{tpu_custom_call.1} parent=5 // pred_region
        %s524 = ssub.s32 %s14, 2
      $region60: #{tpu_custom_call.1} parent=5 // pred_fallthru
        _
    $region6: #{tpu_custom_call.1} parent=1 // loop_footer
      %s18 = sadd.s32 1, %s14
    $region7: #{tpu_custom_call.1} parent=1 // loop_footer_branch
      %13 = sbr.rel target = $region3
    $region8: #{tpu_custom_call.1} parent=1 // loop_exit
      _
    %525 = vsyncpa [#allocation3], 1
    %s526 = scalar_lea.sflag [#allocation3], 1
    %527 = vsyncpa %s526, 1
    %528 = vsyncpa [#allocation5], 1
    %s529 = scalar_lea.sflag [#allocation5], 1
    %530 = vsyncpa %s529, 1

</llo_original>
